<compile_context>
chip_gen: v6e
topology: v6e:2x2x1
jax: 0.10.0
libtpu: 0.0.40
codegen_flags: <defaults>
</compile_context>

<pallas_src>
import functools

import jax
import jax.numpy as jnp
from jax import lax
from jax.experimental import pallas as pl
from jax.experimental.pallas import tpu as pltpu


def _round_up(x, m):
    return (x + m - 1) // m * m


def _cdiv(a, b):
    return (a + b - 1) // b


def _bottleneck1d_kernel(x_ref, xh_ref, vio_ref, vmid_ref, w1_ref, w2_ref, w3_ref,
                         o_ref, *, seq_len, tile_l):
    """One (batch, L-tile) step.

    x_ref  : (1, TL, Cio)   bf16  input tile (channel/L padded)
    xh_ref : (1, 1, 2, Cio) bf16  halo rows: row0 = x[row0-1], row1 = x[row0+TL]
    vio_ref: (8, Cio) f32 packed per-channel vectors [a0, b0, c3, 0...]
    vmid_ref:(8, Cmid) f32 packed per-channel vectors [a1, b1+a1*c1, a2, b2+a2*c2, 0...]
    w1_ref : (Cio, Cmid)     bf16  conv1 (k=1) weights, (in, out)
    w2_ref : (3, Cmid, Cmid) bf16  conv2 (k=3) weights, taps [l-1, l, l+1], (in, out)
    w3_ref : (Cmid, Cio)     bf16  conv3 (k=1) weights, (in, out)
    """
    lt = pl.program_id(1)
    row0 = lt * tile_l                       # global row index of the tile's first row

    a0 = vio_ref[0:1, :]
    b0 = vio_ref[1:2, :]
    c3 = vio_ref[2:3, :]
    a1 = vmid_ref[0:1, :]
    b1 = vmid_ref[1:2, :]                    # conv1 bias folded in
    a2 = vmid_ref[2:3, :]
    b2 = vmid_ref[3:4, :]                    # conv2 bias folded in

    # ---- stage 1: BN0 -> ReLU -> conv1 (k=1) -> BN1 -> ReLU ----------------
    # The 2 halo rows ride along in the same matmul (no separate tiny MXU pass).
    xa = jnp.concatenate([x_ref[0], xh_ref[0, 0]], axis=0).astype(jnp.float32)
    h = jnp.maximum(xa * a0 + b0, 0.0)                          # (TL+2, Cio)
    h = jnp.dot(h.astype(jnp.bfloat16), w1_ref[...],
                preferred_element_type=jnp.float32)             # (TL+2, Cmid)
    g_full = jnp.maximum(h * a1 + b1, 0.0)

    g = g_full[:tile_l]                                         # (TL, Cmid)
    g_left = g_full[tile_l:tile_l + 1]                          # activation at row0-1
    g_right = g_full[tile_l + 1:tile_l + 2]                     # activation at row0+TL

    # Zero rows beyond the real sequence so the k=3 taps see exactly the
    # original zero-padded conv input (also neutralizes the L-padding rows).
    ridx = lax.broadcasted_iota(jnp.int32, (tile_l, 1), 0)
    g = jnp.where(ridx + row0 < seq_len, g, 0.0)
    # Halo activations, gated to zero where the tap falls outside [0, L).
    g_left = g_left * jnp.where(row0 > 0, 1.0, 0.0)
    g_right = g_right * jnp.where(row0 + tile_l < seq_len, 1.0, 0.0)

    # ---- conv2 (k=3, padding=1): three accumulating MXU passes --------------
    # Shifted copies via XLU roll (non-negative shifts) + single-row blend.
    g_prev = jnp.where(ridx == 0, g_left,
                       pltpu.roll(g, shift=1, axis=0))
    g_next = jnp.where(ridx == tile_l - 1, g_right,
                       pltpu.roll(g, shift=tile_l - 1, axis=0))
    h2 = jnp.dot(g_prev.astype(jnp.bfloat16), w2_ref[0],
                 preferred_element_type=jnp.float32)
    h2 = h2 + jnp.dot(g.astype(jnp.bfloat16), w2_ref[1],
                      preferred_element_type=jnp.float32)
    h2 = h2 + jnp.dot(g_next.astype(jnp.bfloat16), w2_ref[2],
                      preferred_element_type=jnp.float32)

    # ---- BN2 -> ReLU -> conv3 (k=1) + bias + residual ------------------------
    h2 = jnp.maximum(h2 * a2 + b2, 0.0)
    out = jnp.dot(h2.astype(jnp.bfloat16), w3_ref[...],
                  preferred_element_type=jnp.float32) + c3
    # Re-read the input block for the residual so the f32 x tile is not held
    # live across the whole body.
    o_ref[0] = x_ref[0].astype(jnp.float32) + out


def bottleneck1d_pallas(x_ncl, kernel_params, *, tile_l=1024):
    """x_ncl: (N, C, L) float32 (PyTorch layout). Returns (N, C, L) float32."""
    vec_io, vec_mid, w1, w2, w3 = kernel_params
    cio = vec_io.shape[1]
    cmid = vec_mid.shape[1]
    n, c, seq_len = x_ncl.shape
    assert c <= cio, "channel padding mismatch"
    assert w1.shape == (cio, cmid) and w2.shape == (3, cmid, cmid) and w3.shape == (cmid, cio), \
        "weight padding mismatch (residual requires inplanes == outplanes)"

    # Tile length: multiple of 16 (bf16 sublane packing), capped at the padded seq.
    tl = _round_up(min(tile_l, _round_up(seq_len, 16)), 16)
    num_tiles = _cdiv(seq_len, tl)
    # v7x shards the "parallel" grid axes over its 2 TensorCores: make sure the
    # grid has >= 2 steps when possible.
    if n == 1 and num_tiles == 1 and seq_len > 16:
        tl = _round_up(_cdiv(seq_len, 2), 16)
        num_tiles = _cdiv(seq_len, tl)
    l_pad = num_tiles * tl

    # Layout plumbing: NCL -> NLC, pad channels to Cio and L to a tile multiple;
    # HBM copies of x / halo stored in bf16 (halves the dominant read stream).
    x_nlc = jnp.transpose(x_ncl, (0, 2, 1)).astype(jnp.float32)
    x_p = jnp.pad(x_nlc, ((0, 0), (0, l_pad - seq_len), (0, cio - c)))
    x_p = x_p.astype(jnp.bfloat16)                                        # (N, Lp, Cio)

    # Per-tile halo rows: row 0 = x[start-1], row 1 = x[start+TL]
    # (clipped gather; out-of-range taps are gated to zero inside the kernel).
    starts = jnp.arange(num_tiles) * tl
    left_idx = jnp.clip(starts - 1, 0, l_pad - 1)
    right_idx = jnp.clip(starts + tl, 0, l_pad - 1)
    halo_idx = jnp.stack([left_idx, right_idx], axis=1)                   # (T, 2)
    x_halo = x_p[:, halo_idx, :]                                          # (N, T, 2, Cio)

    kernel = functools.partial(_bottleneck1d_kernel, seq_len=seq_len, tile_l=tl)

    # NOTE: the grid-invariant operands (vec/w1/w2/w3) are tiny at these padded
    # widths; single-buffering them (pipeline_mode=pl.Buffered(1)) only matters
    # for very large Cio/Cmid on v7x's 64 MiB VMEM.
    out = pl.pallas_call(
        kernel,
        out_shape=jax.ShapeDtypeStruct((n, l_pad, cio), jnp.float32),
        grid=(n, num_tiles),
        in_specs=[
            pl.BlockSpec((1, tl, cio), lambda i, j: (i, j, 0)),           # x tile (bf16)
            pl.BlockSpec((1, 1, 2, cio), lambda i, j: (i, j, 0, 0)),      # halo rows (bf16)
            pl.BlockSpec((8, cio), lambda i, j: (0, 0)),                  # packed io vectors
            pl.BlockSpec((8, cmid), lambda i, j: (0, 0)),                 # packed mid vectors
            pl.BlockSpec((cio, cmid), lambda i, j: (0, 0)),               # w1
            pl.BlockSpec((3, cmid, cmid), lambda i, j: (0, 0, 0)),        # w2 taps [l-1,l,l+1]
            pl.BlockSpec((cmid, cio), lambda i, j: (0, 0)),               # w3
        ],
        out_specs=pl.BlockSpec((1, tl, cio), lambda i, j: (i, j, 0)),
        compiler_params=pltpu.CompilerParams(
            dimension_semantics=("parallel", "parallel"),
            vmem_limit_bytes=48 * 1024 * 1024,    # headroom under v7x 64 MiB physical
        ),
    )(x_p, x_halo, vec_io, vec_mid, w1, w2, w3)

    return jnp.transpose(out[:, :seq_len, :c], (0, 2, 1))


def _fold_bn(gamma, beta, running_mean, running_var, eps=1e-5):
    a = gamma / jnp.sqrt(running_var + eps)
    b = beta - running_mean * a
    return a, b


def make_params(key, inplanes, outplanes):
    """Deterministic synthetic parameters. Returns (pytorch-layout, kernel-layout)."""
    planes = outplanes // 2
    keys = jax.random.split(key, 24)
    k = iter(keys)

    def bn_params(c):
        gamma = jax.random.uniform(next(k), (c,), minval=0.5, maxval=1.5, dtype=jnp.float32)
        beta = jax.random.normal(next(k), (c,), dtype=jnp.float32) * 0.1
        rmean = jax.random.normal(next(k), (c,), dtype=jnp.float32) * 0.1
        rvar = jax.random.uniform(next(k), (c,), minval=0.5, maxval=1.5, dtype=jnp.float32)
        return _fold_bn(gamma, beta, rmean, rvar)

    a0, b0 = bn_params(inplanes)
    w1_oik = jax.random.normal(next(k), (planes, inplanes, 1), dtype=jnp.float32) * 0.2
    c1 = jax.random.normal(next(k), (planes,), dtype=jnp.float32) * 0.1
    a1, b1 = bn_params(planes)
    w2_oik = jax.random.normal(next(k), (planes, planes, 3), dtype=jnp.float32) * 0.2
    c2 = jax.random.normal(next(k), (planes,), dtype=jnp.float32) * 0.1
    a2, b2 = bn_params(planes)
    w3_oik = jax.random.normal(next(k), (outplanes, planes, 1), dtype=jnp.float32) * 0.2
    c3 = jax.random.normal(next(k), (outplanes,), dtype=jnp.float32) * 0.1

    torch_layout = (a0, b0, w1_oik, c1, a1, b1, w2_oik, c2, a2, b2, w3_oik, c3)

    # ---- kernel layout: two padded widths (Cio for input/output/residual,
    #      Cmid for the bottleneck), conv biases folded into the following BN
    #      shift, per-channel vectors packed, weights stored bf16 (in, out). ----
    cio = max(_round_up(inplanes, 128), _round_up(outplanes, 128))
    cmid = _round_up(planes, 128)

    vec_io = jnp.zeros((8, cio), jnp.float32)
    vec_io = (vec_io.at[0, :inplanes].set(a0)
                    .at[1, :inplanes].set(b0)
                    .at[2, :outplanes].set(c3))
    b1f = a1 * c1 + b1      # fold conv1 bias into BN1 shift
    b2f = a2 * c2 + b2      # fold conv2 bias into BN2 shift
    vec_mid = jnp.zeros((8, cmid), jnp.float32)
    vec_mid = (vec_mid.at[0, :planes].set(a1)
                      .at[1, :planes].set(b1f)
                      .at[2, :planes].set(a2)
                      .at[3, :planes].set(b2f))

    w1_pad = jnp.zeros((cio, cmid), jnp.float32).at[:inplanes, :planes].set(w1_oik[:, :, 0].T)
    w2_pad = jnp.zeros((3, cmid, cmid), jnp.float32)
    for tap in range(3):
        w2_pad = w2_pad.at[tap, :planes, :planes].set(w2_oik[:, :, tap].T)
    w3_pad = jnp.zeros((cmid, cio), jnp.float32).at[:planes, :outplanes].set(w3_oik[:, :, 0].T)

    kernel_layout = (vec_io, vec_mid,
                     w1_pad.astype(jnp.bfloat16),
                     w2_pad.astype(jnp.bfloat16),
                     w3_pad.astype(jnp.bfloat16))
    return torch_layout, kernel_layout


def ref_forward_ncl(x, params_torch):
    """Pure-JAX f32 reference in PyTorch NCL layout (eval-mode BN)."""
    (a0, b0, w1, c1, a1, b1, w2, c2, a2, b2, w3, c3) = params_torch
    dn = ('NCH', 'OIH', 'NCH')
    h = jnp.maximum(x * a0[None, :, None] + b0[None, :, None], 0.0)
    h = lax.conv_general_dilated(h, w1, (1,), [(0, 0)], dimension_numbers=dn)
    h = h + c1[None, :, None]
    h = jnp.maximum(h * a1[None, :, None] + b1[None, :, None], 0.0)
    h = lax.conv_general_dilated(h, w2, (1,), [(1, 1)], dimension_numbers=dn)
    h = h + c2[None, :, None]
    h = jnp.maximum(h * a2[None, :, None] + b2[None, :, None], 0.0)
    out = lax.conv_general_dilated(h, w3, (1,), [(0, 0)], dimension_numbers=dn)
    out = out + c3[None, :, None]
    return x + out


if __name__ == "__main__":
    N, C, L = 2, 8, 20          # batch, inplanes(=outplanes), sequence length
    key = jax.random.PRNGKey(0)
    kx, kp = jax.random.split(key)

    x_ncl = jax.random.normal(kx, (N, C, L), dtype=jnp.float32)   # PyTorch layout
    params_torch, params_kernel = make_params(kp, C, C)

    y_ref = jax.block_until_ready(ref_forward_ncl(x_ncl, params_torch))

    # Multi-tile path: tile_l=16 -> 2 L-tiles (exercises the halo + L padding).
    y_multi = jax.block_until_ready(bottleneck1d_pallas(x_ncl, params_kernel, tile_l=16))
    # Default tile size: whole (padded) sequence in a single tile.
    y_single = jax.block_until_ready(bottleneck1d_pallas(x_ncl, params_kernel))

    assert y_multi.shape == (N, C, L) and y_single.shape == (N, C, L)
    # Tolerance accounts for bf16 HBM storage of x / bf16 MXU inputs (f32
    # accumulation) vs. the all-f32 reference.
    for y in (y_multi, y_single):
        err = float(jnp.max(jnp.abs(y - y_ref)))
        assert jnp.allclose(y, y_ref, rtol=2e-2, atol=3e-2), err

    print("KERNEL_OK")
</pallas_src>

<mosaic_0001>
module attributes {stable_mosaic.version = 11 : i64} {
  func.func @_bottleneck1d_kernel(%arg0: i32, %arg1: i32, %arg2: memref<1x16x128xbf16, #tpu.memory_space<vmem>>, %arg3: memref<1x1x2x128xbf16, #tpu.memory_space<vmem>>, %arg4: memref<8x128xf32, #tpu.memory_space<vmem>>, %arg5: memref<8x128xf32, #tpu.memory_space<vmem>>, %arg6: memref<128x128xbf16, #tpu.memory_space<vmem>>, %arg7: memref<3x128x128xbf16, #tpu.memory_space<vmem>>, %arg8: memref<128x128xbf16, #tpu.memory_space<vmem>>, %arg9: memref<1x16x128xf32, #tpu.memory_space<vmem>>) attributes {dimension_semantics = [#tpu.dimension_semantics<parallel>, #tpu.dimension_semantics<parallel>], iteration_bounds = array<i64: 2, 2>, scalar_prefetch = 0 : i64, scratch_operands = 0 : i64, tpu.core_type = #tpu.core_type<tc>, window_params = [{transform_indices = @transform_0, window_bounds = array<i64: 1, 16, 128>}, {transform_indices = @transform_1, window_bounds = array<i64: 1, 1, 2, 128>}, {pipeline_mode = #tpu.pipeline_mode<synchronous>, transform_indices = @transform_2, window_bounds = array<i64: 8, 128>}, {pipeline_mode = #tpu.pipeline_mode<synchronous>, transform_indices = @transform_3, window_bounds = array<i64: 8, 128>}, {pipeline_mode = #tpu.pipeline_mode<synchronous>, transform_indices = @transform_4, window_bounds = array<i64: 128, 128>}, {pipeline_mode = #tpu.pipeline_mode<synchronous>, transform_indices = @transform_5, window_bounds = array<i64: 3, 128, 128>}, {pipeline_mode = #tpu.pipeline_mode<synchronous>, transform_indices = @transform_6, window_bounds = array<i64: 128, 128>}, {transform_indices = @transform_7, window_bounds = array<i64: 1, 16, 128>}]} {
    %c16_i32 = arith.constant 16 : i32
    %0 = arith.muli %arg1, %c16_i32 : i32
    %c0 = arith.constant 0 : index
    %c0_0 = arith.constant 0 : index
    %1 = vector.load %arg4[%c0, %c0_0] : memref<8x128xf32, #tpu.memory_space<vmem>>, vector<1x128xf32>
    %c1 = arith.constant 1 : index
    %c0_1 = arith.constant 0 : index
    %2 = vector.load %arg4[%c1, %c0_1] : memref<8x128xf32, #tpu.memory_space<vmem>>, vector<1x128xf32>
    %c2 = arith.constant 2 : index
    %c0_2 = arith.constant 0 : index
    %3 = vector.load %arg4[%c2, %c0_2] : memref<8x128xf32, #tpu.memory_space<vmem>>, vector<1x128xf32>
    %c0_3 = arith.constant 0 : index
    %c0_4 = arith.constant 0 : index
    %4 = vector.load %arg5[%c0_3, %c0_4] : memref<8x128xf32, #tpu.memory_space<vmem>>, vector<1x128xf32>
    %c1_5 = arith.constant 1 : index
    %c0_6 = arith.constant 0 : index
    %5 = vector.load %arg5[%c1_5, %c0_6] : memref<8x128xf32, #tpu.memory_space<vmem>>, vector<1x128xf32>
    %c2_7 = arith.constant 2 : index
    %c0_8 = arith.constant 0 : index
    %6 = vector.load %arg5[%c2_7, %c0_8] : memref<8x128xf32, #tpu.memory_space<vmem>>, vector<1x128xf32>
    %c3 = arith.constant 3 : index
    %c0_9 = arith.constant 0 : index
    %7 = vector.load %arg5[%c3, %c0_9] : memref<8x128xf32, #tpu.memory_space<vmem>>, vector<1x128xf32>
    %c0_10 = arith.constant 0 : index
    %c0_11 = arith.constant 0 : index
    %c0_12 = arith.constant 0 : index
    %8 = vector.load %arg2[%c0_10, %c0_11, %c0_12] : memref<1x16x128xbf16, #tpu.memory_space<vmem>>, vector<1x16x128xbf16>
    %9 = vector.shape_cast %8 : vector<1x16x128xbf16> to vector<16x128xbf16>
    %c0_13 = arith.constant 0 : index
    %c0_14 = arith.constant 0 : index
    %c0_15 = arith.constant 0 : index
    %c0_16 = arith.constant 0 : index
    %10 = vector.load %arg3[%c0_13, %c0_14, %c0_15, %c0_16] : memref<1x1x2x128xbf16, #tpu.memory_space<vmem>>, vector<1x1x2x128xbf16>
    %11 = vector.shape_cast %10 : vector<1x1x2x128xbf16> to vector<2x128xbf16>
    %12 = tpu.concatenate %9, %11 in 0 : vector<16x128xbf16>, vector<2x128xbf16> -> vector<18x128xbf16>
    %13 = arith.extf %12 : vector<18x128xbf16> to vector<18x128xf32>
    %14 = vector.broadcast %1 : vector<1x128xf32> to vector<18x128xf32>
    %15 = arith.mulf %13, %14 : vector<18x128xf32>
    %16 = vector.broadcast %2 : vector<1x128xf32> to vector<18x128xf32>
    %17 = arith.addf %15, %16 : vector<18x128xf32>
    %cst = arith.constant 0.000000e+00 : f32
    %18 = vector.broadcast %cst : f32 to vector<18x128xf32>
    %19 = arith.maximumf %17, %18 : vector<18x128xf32>
    %20 = arith.truncf %19 : vector<18x128xf32> to vector<18x128xbf16>
    %c0_17 = arith.constant 0 : index
    %c0_18 = arith.constant 0 : index
    %21 = vector.load %arg6[%c0_17, %c0_18] : memref<128x128xbf16, #tpu.memory_space<vmem>>, vector<128x128xbf16>
    %cst_19 = arith.constant dense<0.000000e+00> : vector<18x128xf32>
    %22 = tpu.matmul %20, %21, %cst_19 {dimension_numbers = #tpu.dot_dimension_numbers<[1], [0], [0], [1], [0, 0, 1, 1], [], []>} : vector<18x128xbf16>, vector<128x128xbf16>, vector<18x128xf32> -> vector<18x128xf32>
    %23 = vector.broadcast %4 : vector<1x128xf32> to vector<18x128xf32>
    %24 = arith.mulf %22, %23 : vector<18x128xf32>
    %25 = vector.broadcast %5 : vector<1x128xf32> to vector<18x128xf32>
    %26 = arith.addf %24, %25 : vector<18x128xf32>
    %cst_20 = arith.constant 0.000000e+00 : f32
    %27 = vector.broadcast %cst_20 : f32 to vector<18x128xf32>
    %28 = arith.maximumf %26, %27 : vector<18x128xf32>
    %29 = vector.extract_strided_slice %28 {offsets = [0, 0], sizes = [16, 128], strides = [1, 1]} : vector<18x128xf32> to vector<16x128xf32>
    %30 = vector.extract_strided_slice %28 {offsets = [16, 0], sizes = [1, 128], strides = [1, 1]} : vector<18x128xf32> to vector<1x128xf32>
    %31 = vector.extract_strided_slice %28 {offsets = [17, 0], sizes = [1, 128], strides = [1, 1]} : vector<18x128xf32> to vector<1x128xf32>
    %32 = tpu.iota {dimensions = array<i32: 0>} : vector<16x1xi32>
    %33 = vector.broadcast %0 : i32 to vector<16x1xi32>
    %34 = arith.addi %32, %33 : vector<16x1xi32>
    %c20_i32 = arith.constant 20 : i32
    %35 = vector.broadcast %c20_i32 : i32 to vector<16x1xi32>
    %36 = arith.cmpi slt, %34, %35 : vector<16x1xi32>
    %cst_21 = arith.constant 0.000000e+00 : f32
    %37 = vector.shape_cast %36 : vector<16x1xi1> to vector<16x1xi1>
    %38 = vector.broadcast %37 : vector<16x1xi1> to vector<16x128xi1>
    %39 = vector.broadcast %cst_21 : f32 to vector<16x128xf32>
    %40 = arith.select %38, %29, %39 : vector<16x128xi1>, vector<16x128xf32>
    %c0_i32 = arith.constant 0 : i32
    %41 = arith.cmpi sgt, %0, %c0_i32 : i32
    %cst_22 = arith.constant 1.000000e+00 : f32
    %cst_23 = arith.constant 0.000000e+00 : f32
    %42 = arith.select %41, %cst_22, %cst_23 : f32
    %43 = vector.broadcast %42 : f32 to vector<1x128xf32>
    %44 = arith.mulf %30, %43 : vector<1x128xf32>
    %c16_i32_24 = arith.constant 16 : i32
    %45 = arith.addi %0, %c16_i32_24 : i32
    %c20_i32_25 = arith.constant 20 : i32
    %46 = arith.cmpi slt, %45, %c20_i32_25 : i32
    %cst_26 = arith.constant 1.000000e+00 : f32
    %cst_27 = arith.constant 0.000000e+00 : f32
    %47 = arith.select %46, %cst_26, %cst_27 : f32
    %48 = vector.broadcast %47 : f32 to vector<1x128xf32>
    %49 = arith.mulf %31, %48 : vector<1x128xf32>
    %c0_i32_28 = arith.constant 0 : i32
    %50 = vector.broadcast %c0_i32_28 : i32 to vector<16x1xi32>
    %51 = arith.cmpi eq, %32, %50 : vector<16x1xi32>
    %c1_i32 = arith.constant 1 : i32
    %52 = tpu.dynamic_rotate %40 by %c1_i32 dim 0 : vector<16x128xf32>, i32 -> vector<16x128xf32>
    %53 = vector.shape_cast %51 : vector<16x1xi1> to vector<16x1xi1>
    %54 = vector.broadcast %53 : vector<16x1xi1> to vector<16x128xi1>
    %55 = vector.shape_cast %44 : vector<1x128xf32> to vector<1x128xf32>
    %56 = vector.broadcast %55 : vector<1x128xf32> to vector<16x128xf32>
    %57 = arith.select %54, %56, %52 : vector<16x128xi1>, vector<16x128xf32>
    %c15_i32 = arith.constant 15 : i32
    %58 = vector.broadcast %c15_i32 : i32 to vector<16x1xi32>
    %59 = arith.cmpi eq, %32, %58 : vector<16x1xi32>
    %c15_i32_29 = arith.constant 15 : i32
    %60 = tpu.dynamic_rotate %40 by %c15_i32_29 dim 0 : vector<16x128xf32>, i32 -> vector<16x128xf32>
    %61 = vector.shape_cast %59 : vector<16x1xi1> to vector<16x1xi1>
    %62 = vector.broadcast %61 : vector<16x1xi1> to vector<16x128xi1>
    %63 = vector.shape_cast %49 : vector<1x128xf32> to vector<1x128xf32>
    %64 = vector.broadcast %63 : vector<1x128xf32> to vector<16x128xf32>
    %65 = arith.select %62, %64, %60 : vector<16x128xi1>, vector<16x128xf32>
    %66 = arith.truncf %57 : vector<16x128xf32> to vector<16x128xbf16>
    %c0_30 = arith.constant 0 : index
    %c0_31 = arith.constant 0 : index
    %c0_32 = arith.constant 0 : index
    %67 = vector.load %arg7[%c0_30, %c0_31, %c0_32] : memref<3x128x128xbf16, #tpu.memory_space<vmem>>, vector<1x128x128xbf16>
    %68 = vector.shape_cast %67 : vector<1x128x128xbf16> to vector<128x128xbf16>
    %cst_33 = arith.constant dense<0.000000e+00> : vector<16x128xf32>
    %69 = tpu.matmul %66, %68, %cst_33 {dimension_numbers = #tpu.dot_dimension_numbers<[1], [0], [0], [1], [0, 0, 1, 1], [], []>} : vector<16x128xbf16>, vector<128x128xbf16>, vector<16x128xf32> -> vector<16x128xf32>
    %70 = arith.truncf %40 : vector<16x128xf32> to vector<16x128xbf16>
    %c1_34 = arith.constant 1 : index
    %c0_35 = arith.constant 0 : index
    %c0_36 = arith.constant 0 : index
    %71 = vector.load %arg7[%c1_34, %c0_35, %c0_36] : memref<3x128x128xbf16, #tpu.memory_space<vmem>>, vector<1x128x128xbf16>
    %72 = vector.shape_cast %71 : vector<1x128x128xbf16> to vector<128x128xbf16>
    %cst_37 = arith.constant dense<0.000000e+00> : vector<16x128xf32>
    %73 = tpu.matmul %70, %72, %cst_37 {dimension_numbers = #tpu.dot_dimension_numbers<[1], [0], [0], [1], [0, 0, 1, 1], [], []>} : vector<16x128xbf16>, vector<128x128xbf16>, vector<16x128xf32> -> vector<16x128xf32>
    %74 = arith.addf %69, %73 : vector<16x128xf32>
    %75 = arith.truncf %65 : vector<16x128xf32> to vector<16x128xbf16>
    %c2_38 = arith.constant 2 : index
    %c0_39 = arith.constant 0 : index
    %c0_40 = arith.constant 0 : index
    %76 = vector.load %arg7[%c2_38, %c0_39, %c0_40] : memref<3x128x128xbf16, #tpu.memory_space<vmem>>, vector<1x128x128xbf16>
    %77 = vector.shape_cast %76 : vector<1x128x128xbf16> to vector<128x128xbf16>
    %cst_41 = arith.constant dense<0.000000e+00> : vector<16x128xf32>
    %78 = tpu.matmul %75, %77, %cst_41 {dimension_numbers = #tpu.dot_dimension_numbers<[1], [0], [0], [1], [0, 0, 1, 1], [], []>} : vector<16x128xbf16>, vector<128x128xbf16>, vector<16x128xf32> -> vector<16x128xf32>
    %79 = arith.addf %74, %78 : vector<16x128xf32>
    %80 = vector.broadcast %6 : vector<1x128xf32> to vector<16x128xf32>
    %81 = arith.mulf %79, %80 : vector<16x128xf32>
    %82 = vector.broadcast %7 : vector<1x128xf32> to vector<16x128xf32>
    %83 = arith.addf %81, %82 : vector<16x128xf32>
    %cst_42 = arith.constant 0.000000e+00 : f32
    %84 = vector.broadcast %cst_42 : f32 to vector<16x128xf32>
    %85 = arith.maximumf %83, %84 : vector<16x128xf32>
    %86 = arith.truncf %85 : vector<16x128xf32> to vector<16x128xbf16>
    %c0_43 = arith.constant 0 : index
    %c0_44 = arith.constant 0 : index
    %87 = vector.load %arg8[%c0_43, %c0_44] : memref<128x128xbf16, #tpu.memory_space<vmem>>, vector<128x128xbf16>
    %cst_45 = arith.constant dense<0.000000e+00> : vector<16x128xf32>
    %88 = tpu.matmul %86, %87, %cst_45 {dimension_numbers = #tpu.dot_dimension_numbers<[1], [0], [0], [1], [0, 0, 1, 1], [], []>} : vector<16x128xbf16>, vector<128x128xbf16>, vector<16x128xf32> -> vector<16x128xf32>
    %89 = vector.broadcast %3 : vector<1x128xf32> to vector<16x128xf32>
    %90 = arith.addf %88, %89 : vector<16x128xf32>
    %c0_46 = arith.constant 0 : index
    %c0_47 = arith.constant 0 : index
    %c0_48 = arith.constant 0 : index
    %91 = vector.load %arg2[%c0_46, %c0_47, %c0_48] : memref<1x16x128xbf16, #tpu.memory_space<vmem>>, vector<1x16x128xbf16>
    %92 = vector.shape_cast %91 : vector<1x16x128xbf16> to vector<16x128xbf16>
    %93 = arith.extf %92 : vector<16x128xbf16> to vector<16x128xf32>
    %94 = arith.addf %93, %90 : vector<16x128xf32>
    %c0_49 = arith.constant 0 : index
    %c0_50 = arith.constant 0 : index
    %c0_51 = arith.constant 0 : index
    %95 = vector.load %arg9[%c0_49, %c0_50, %c0_51] : memref<1x16x128xf32, #tpu.memory_space<vmem>>, vector<1x16x128xf32>
    %96 = vector.shape_cast %95 : vector<1x16x128xf32> to vector<16x128xf32>
    %97 = vector.shape_cast %94 : vector<16x128xf32> to vector<1x16x128xf32>
    tpu.vector_store %arg9[%c0_49, %c0_50, %c0_51], %97 {strides = array<i32>} : memref<1x16x128xf32, #tpu.memory_space<vmem>>, vector<1x16x128xf32>,
    return
  }
  func.func @transform_0(%arg0: i32, %arg1: i32) -> (i32, i32, i32) {
    %c0_i32 = arith.constant 0 : i32
    %c0_i32_0 = arith.constant 0 : i32
    return %arg0, %arg1, %c0_i32 : i32, i32, i32
  }
  func.func @transform_1(%arg0: i32, %arg1: i32) -> (i32, i32, i32, i32) {
    %c0_i32 = arith.constant 0 : i32
    %c0_i32_0 = arith.constant 0 : i32
    %c0_i32_1 = arith.constant 0 : i32
    return %arg0, %arg1, %c0_i32, %c0_i32_0 : i32, i32, i32, i32
  }
  func.func @transform_2(%arg0: i32, %arg1: i32) -> (i32, i32) {
    %c0_i32 = arith.constant 0 : i32
    %c0_i32_0 = arith.constant 0 : i32
    %c0_i32_1 = arith.constant 0 : i32
    return %c0_i32, %c0_i32_0 : i32, i32
  }
  func.func @transform_3(%arg0: i32, %arg1: i32) -> (i32, i32) {
    %c0_i32 = arith.constant 0 : i32
    %c0_i32_0 = arith.constant 0 : i32
    %c0_i32_1 = arith.constant 0 : i32
    return %c0_i32, %c0_i32_0 : i32, i32
  }
  func.func @transform_4(%arg0: i32, %arg1: i32) -> (i32, i32) {
    %c0_i32 = arith.constant 0 : i32
    %c0_i32_0 = arith.constant 0 : i32
    %c0_i32_1 = arith.constant 0 : i32
    return %c0_i32, %c0_i32_0 : i32, i32
  }
  func.func @transform_5(%arg0: i32, %arg1: i32) -> (i32, i32, i32) {
    %c0_i32 = arith.constant 0 : i32
    %c0_i32_0 = arith.constant 0 : i32
    %c0_i32_1 = arith.constant 0 : i32
    %c0_i32_2 = arith.constant 0 : i32
    return %c0_i32, %c0_i32_0, %c0_i32_1 : i32, i32, i32
  }
  func.func @transform_6(%arg0: i32, %arg1: i32) -> (i32, i32) {
    %c0_i32 = arith.constant 0 : i32
    %c0_i32_0 = arith.constant 0 : i32
    %c0_i32_1 = arith.constant 0 : i32
    return %c0_i32, %c0_i32_0 : i32, i32
  }
  func.func @transform_7(%arg0: i32, %arg1: i32) -> (i32, i32, i32) {
    %c0_i32 = arith.constant 0 : i32
    %c0_i32_0 = arith.constant 0 : i32
    return %arg0, %arg1, %c0_i32 : i32, i32, i32
  }
}

</mosaic_0001>

<llo_original>
// kernel: tpu_custom_call.1
$region0: #{tpu_custom_call.1}
  #allocation0 [shape = 'u32[]', space=smem, size = 0x4, offset = 0x4, fixed_abs, tag = 'smem constant byte address 0x4 - core index']
  #allocation1 [shape = 'u32[144,128]{1,0:T(1,128)}', space=vmem, size = 0x12000, scoped, tag = 'internal scratch']
  %s0 = inlined_call_operand.hbm [shape: bf16[2,32,128], index: 0, kind: input, shape index: {}]
  %s1 = inlined_call_operand.hbm [shape: bf16[2,2,2,128], index: 1, kind: input, shape index: {}]
  %s2 = inlined_call_operand.hbm [shape: f32[8,128], index: 2, kind: input, shape index: {}]
  %s3 = inlined_call_operand.hbm [shape: f32[8,128], index: 3, kind: input, shape index: {}]
  %s4 = inlined_call_operand.hbm [shape: bf16[128,128], index: 4, kind: input, shape index: {}]
  %s5 = inlined_call_operand.hbm [shape: bf16[3,128,128], index: 5, kind: input, shape index: {}]
  %s6 = inlined_call_operand.hbm [shape: bf16[128,128], index: 6, kind: input, shape index: {}]
  %s7 = inlined_call_operand.hbm [shape: f32[2,32,128], index: 7, kind: output, shape index: {}]
  %s8 = sld [smem:[#allocation0]]
  $region89: #{tpu_custom_call.1} parent=0
    _
  %s10 = ssub.s32 1, %s8
  %s11 = scalar_select 0, %s10, %s8
  $region1: #{tpu_custom_call.1} parent=0
    #allocation2 [shape = 'u8[8192]{0}', space=vmem, size = 0x2000, scoped, tag = 'input window, operand 0']
    #allocation3 [shape = 's32[2]{0}', space=sflag, size = 0x8, scoped, tag = 'scoped memory for tpu_custom_call.1']
    #allocation4 [shape = 's32[2]{0}', space=sflag, size = 0x8, scoped, tag = 'scoped memory for tpu_custom_call.1']
    #allocation5 [shape = 'u8[1024]{0}', space=vmem, size = 0x400, scoped, tag = 'input window, operand 1']
    #allocation6 [shape = 's32[2]{0}', space=sflag, size = 0x8, scoped, tag = 'scoped memory for tpu_custom_call.1']
    #allocation7 [shape = 'u8[4096]{0}', space=vmem, size = 0x1000, scoped, tag = 'input window, operand 2, single buffered']
    #allocation8 [shape = 'u8[4096]{0}', space=vmem, size = 0x1000, scoped, tag = 'input window, operand 3, single buffered']
    #allocation9 [shape = 's32[1]{0}', space=sflag, size = 0x4, scoped, tag = 'scoped memory for tpu_custom_call.1']
    #allocation10 [shape = 'u8[32768]{0}', space=vmem, size = 0x8000, scoped, tag = 'input window, operand 4, single buffered']
    #allocation11 [shape = 'u8[98304]{0}', space=vmem, size = 0x18000, scoped, tag = 'input window, operand 5, single buffered']
    #allocation12 [shape = 's32[1]{0}', space=sflag, size = 0x4, scoped, tag = 'scoped memory for tpu_custom_call.1']
    #allocation13 [shape = 'u8[32768]{0}', space=vmem, size = 0x8000, scoped, tag = 'input window, operand 6, single buffered']
    #allocation14 [shape = 'u8[16384]{0}', space=vmem, size = 0x4000, scoped, tag = 'output window, operand 0']
    %12 = vsyncpa [#allocation3], 0
    %s13 = scalar_lea.sflag [#allocation3], 1
    %14 = vsyncpa %s13, 0
    %15 = vsyncpa [#allocation6], 0
    %s16 = scalar_lea.sflag [#allocation6], 1
    %17 = vsyncpa %s16, 0
    %18 = vsyncpa [#allocation9], 0
    %19 = vsyncpa [#allocation12], 0
    %20 = vsyncpa [#allocation4], 0
    %s21 = scalar_lea.sflag [#allocation4], 1
    %22 = vsyncpa %s21, 0
    loop: start=0, step=1, limit=6
    $region2: #{tpu_custom_call.1} parent=1 // loop_pre_header
      _
    $region3: #{tpu_custom_call.1} parent=1 // loop_header
      %s24 = sphi 0, %s28
      %p25 = scmp.ge.s32.totalorder %s24, 6
      %s31 = sphi 0, %s43
      %s32 = sphi 0, %s39
      %s33 = sphi 0, %s31
      %s34 = sphi 0, %s32
      %s35 = sphi 0, %s33
      %s36 = sphi 0, %s34
      %s48 = sphi 0, %s50
      %s51 = sphi 0, %s48
      %s52 = sphi 0, %s51
      %s68 = sphi 0, %s52
      %s76 = sphi 0, %s78
      %s79 = sphi 0, %s76
      %s80 = sphi 0, %s79
      %s96 = sphi 0, %s80
      %s100 = sphi 0, %s100
      %s102 = sphi 0, %s100
      %s103 = sphi 0, %s102
      %s117 = sphi 0, %s103
      %s121 = sphi 0, %s121
      %s123 = sphi 0, %s121
      %s124 = sphi 0, %s123
      %s138 = sphi 0, %s124
      %s142 = sphi 0, %s142
      %s144 = sphi 0, %s142
      %s145 = sphi 0, %s144
      %s159 = sphi 0, %s145
      %s163 = sphi 0, %s163
      %s165 = sphi 0, %s163
      %s166 = sphi 0, %s165
      %s180 = sphi 0, %s166
      %s184 = sphi 0, %s184
      %s186 = sphi 0, %s184
      %s187 = sphi 0, %s186
      %s201 = sphi 0, %s187
      %s209 = sphi 0, %s211
      %s212 = sphi 0, %s209
      %s213 = sphi 0, %s212
      %s229 = sphi 0, %s213
    $region4: #{tpu_custom_call.1} parent=1 // loop_header_branch
      %27 = sbr.rel (%p25) target = $region8
    $region5: #{tpu_custom_call.1} parent=1 // loop_body
      %s29 = ssub.s32 %s24, 1
      %s30 = ssub.s32 %s24, 2
      %s37 = sadd.s32 1, %s32
      %p38 = scmp.ge.s32.totalorder %s37, 2
      %s39 = scalar_select %p38, 0, %s37
      %s40 = sadd.s32 1, %s31
      %s41 = scalar_select %p38, %s40, %s31
      %p42 = scmp.ge.s32.totalorder %s41, 2
      %s43 = scalar_select %p42, 0, %s41
      %s44 = ssub.s32 %s31, %s43
      %s45 = ssub.s32 %s32, %s39
      %s46 = sor.u32 %s44, %s45
      %p47 = scmp.eq.s32.totalorder %s46, 0
      %s49 = sadd.s32 %s48, 1
      %s50 = scalar_select %p47, %s48, %s49
      %p53 = pneg %p47
      %p54 = scmp.eq.s32.totalorder %s24, 3
      %p55 = por %p53, %p54
      %p56 = scmp.ne.s32.totalorder %s48, %s51
      %p57 = scmp.eq.s32.totalorder %s24, 0
      %p58 = por %p56, %p57
      %p59 = scmp.ne.s32.totalorder %s48, %s51
      %p60 = scmp.eq.s32.totalorder %s29, 3
      %p61 = por %p59, %p60
      %p62 = scmp.ne.s32.totalorder %s51, %s52
      %p63 = scmp.eq.s32.totalorder %s29, 0
      %p64 = por %p62, %p63
      %p65 = scmp.ne.s32.totalorder %s51, %s52
      %p66 = scmp.eq.s32.totalorder %s30, 3
      %p67 = por %p65, %p66
      %p69 = scmp.ne.s32.totalorder %s52, %s68
      %p70 = scmp.eq.s32.totalorder %s30, 0
      %p71 = por %p69, %p70
      %s72 = ssub.s32 %s31, %s43
      %s73 = ssub.s32 %s32, %s39
      %s74 = sor.u32 %s72, %s73
      %p75 = scmp.eq.s32.totalorder %s74, 0
      %s77 = sadd.s32 %s76, 1
      %s78 = scalar_select %p75, %s76, %s77
      %p81 = pneg %p75
      %p82 = scmp.eq.s32.totalorder %s24, 3
      %p83 = por %p81, %p82
      %p84 = scmp.ne.s32.totalorder %s76, %s79
      %p85 = scmp.eq.s32.totalorder %s24, 0
      %p86 = por %p84, %p85
      %p87 = scmp.ne.s32.totalorder %s76, %s79
      %p88 = scmp.eq.s32.totalorder %s29, 3
      %p89 = por %p87, %p88
      %p90 = scmp.ne.s32.totalorder %s79, %s80
      %p91 = scmp.eq.s32.totalorder %s29, 0
      %p92 = por %p90, %p91
      %p93 = scmp.ne.s32.totalorder %s79, %s80
      %p94 = scmp.eq.s32.totalorder %s30, 3
      %p95 = por %p93, %p94
      %p97 = scmp.ne.s32.totalorder %s80, %s96
      %p98 = scmp.eq.s32.totalorder %s30, 0
      %p99 = por %p97, %p98
      %s101 = sadd.s32 %s100, 1
      %p104 = scmp.eq.s32.totalorder %s24, 3
      %p105 = scmp.ne.s32.totalorder %s100, %s102
      %p106 = scmp.eq.s32.totalorder %s24, 0
      %p107 = por %p105, %p106
      %p108 = scmp.ne.s32.totalorder %s100, %s102
      %p109 = scmp.eq.s32.totalorder %s29, 3
      %p110 = por %p108, %p109
      %p111 = scmp.ne.s32.totalorder %s102, %s103
      %p112 = scmp.eq.s32.totalorder %s29, 0
      %p113 = por %p111, %p112
      %p114 = scmp.ne.s32.totalorder %s102, %s103
      %p115 = scmp.eq.s32.totalorder %s30, 3
      %p116 = por %p114, %p115
      %p118 = scmp.ne.s32.totalorder %s103, %s117
      %p119 = scmp.eq.s32.totalorder %s30, 0
      %p120 = por %p118, %p119
      %s122 = sadd.s32 %s121, 1
      %p125 = scmp.eq.s32.totalorder %s24, 3
      %p126 = scmp.ne.s32.totalorder %s121, %s123
      %p127 = scmp.eq.s32.totalorder %s24, 0
      %p128 = por %p126, %p127
      %p129 = scmp.ne.s32.totalorder %s121, %s123
      %p130 = scmp.eq.s32.totalorder %s29, 3
      %p131 = por %p129, %p130
      %p132 = scmp.ne.s32.totalorder %s123, %s124
      %p133 = scmp.eq.s32.totalorder %s29, 0
      %p134 = por %p132, %p133
      %p135 = scmp.ne.s32.totalorder %s123, %s124
      %p136 = scmp.eq.s32.totalorder %s30, 3
      %p137 = por %p135, %p136
      %p139 = scmp.ne.s32.totalorder %s124, %s138
      %p140 = scmp.eq.s32.totalorder %s30, 0
      %p141 = por %p139, %p140
      %s143 = sadd.s32 %s142, 1
      %p146 = scmp.eq.s32.totalorder %s24, 3
      %p147 = scmp.ne.s32.totalorder %s142, %s144
      %p148 = scmp.eq.s32.totalorder %s24, 0
      %p149 = por %p147, %p148
      %p150 = scmp.ne.s32.totalorder %s142, %s144
      %p151 = scmp.eq.s32.totalorder %s29, 3
      %p152 = por %p150, %p151
      %p153 = scmp.ne.s32.totalorder %s144, %s145
      %p154 = scmp.eq.s32.totalorder %s29, 0
      %p155 = por %p153, %p154
      %p156 = scmp.ne.s32.totalorder %s144, %s145
      %p157 = scmp.eq.s32.totalorder %s30, 3
      %p158 = por %p156, %p157
      %p160 = scmp.ne.s32.totalorder %s145, %s159
      %p161 = scmp.eq.s32.totalorder %s30, 0
      %p162 = por %p160, %p161
      %s164 = sadd.s32 %s163, 1
      %p167 = scmp.eq.s32.totalorder %s24, 3
      %p168 = scmp.ne.s32.totalorder %s163, %s165
      %p169 = scmp.eq.s32.totalorder %s24, 0
      %p170 = por %p168, %p169
      %p171 = scmp.ne.s32.totalorder %s163, %s165
      %p172 = scmp.eq.s32.totalorder %s29, 3
      %p173 = por %p171, %p172
      %p174 = scmp.ne.s32.totalorder %s165, %s166
      %p175 = scmp.eq.s32.totalorder %s29, 0
      %p176 = por %p174, %p175
      %p177 = scmp.ne.s32.totalorder %s165, %s166
      %p178 = scmp.eq.s32.totalorder %s30, 3
      %p179 = por %p177, %p178
      %p181 = scmp.ne.s32.totalorder %s166, %s180
      %p182 = scmp.eq.s32.totalorder %s30, 0
      %p183 = por %p181, %p182
      %s185 = sadd.s32 %s184, 1
      %p188 = scmp.eq.s32.totalorder %s24, 3
      %p189 = scmp.ne.s32.totalorder %s184, %s186
      %p190 = scmp.eq.s32.totalorder %s24, 0
      %p191 = por %p189, %p190
      %p192 = scmp.ne.s32.totalorder %s184, %s186
      %p193 = scmp.eq.s32.totalorder %s29, 3
      %p194 = por %p192, %p193
      %p195 = scmp.ne.s32.totalorder %s186, %s187
      %p196 = scmp.eq.s32.totalorder %s29, 0
      %p197 = por %p195, %p196
      %p198 = scmp.ne.s32.totalorder %s186, %s187
      %p199 = scmp.eq.s32.totalorder %s30, 3
      %p200 = por %p198, %p199
      %p202 = scmp.ne.s32.totalorder %s187, %s201
      %p203 = scmp.eq.s32.totalorder %s30, 0
      %p204 = por %p202, %p203
      %s205 = ssub.s32 %s31, %s43
      %s206 = ssub.s32 %s32, %s39
      %s207 = sor.u32 %s205, %s206
      %p208 = scmp.eq.s32.totalorder %s207, 0
      %s210 = sadd.s32 %s209, 1
      %s211 = scalar_select %p208, %s209, %s210
      %p214 = pneg %p208
      %p215 = scmp.eq.s32.totalorder %s24, 3
      %p216 = por %p214, %p215
      %p217 = scmp.ne.s32.totalorder %s209, %s212
      %p218 = scmp.eq.s32.totalorder %s24, 0
      %p219 = por %p217, %p218
      %p220 = scmp.ne.s32.totalorder %s209, %s212
      %p221 = scmp.eq.s32.totalorder %s29, 3
      %p222 = por %p220, %p221
      %p223 = scmp.ne.s32.totalorder %s212, %s213
      %p224 = scmp.eq.s32.totalorder %s29, 0
      %p225 = por %p223, %p224
      %p226 = scmp.ne.s32.totalorder %s212, %s213
      %p227 = scmp.eq.s32.totalorder %s30, 3
      %p228 = por %p226, %p227
      %p230 = scmp.ne.s32.totalorder %s213, %s229
      %p231 = scmp.eq.s32.totalorder %s30, 0
      %p232 = por %p230, %p231
      %p233 = scmp.le.s32.totalorder 1, %s24
      %p234 = scmp.lt.s32.totalorder %s24, 5
      %p235 = pnand %p233, %p234
      %p236 = pneg %p235
      // Predicated region
      $region9: #{tpu_custom_call.1} parent=5 // pred_check
        _
      $region10: #{tpu_custom_call.1} parent=5 // pred_check_branch
        %238 = sbr.rel (%p235) target = $region12
      $region11: #{tpu_custom_call.1} parent=5 // pred_region
        %s239 = ssub.s32 %s24, 1
        // Predicated region
        $region13: #{tpu_custom_call.1} parent=11 // pred_check
          %p240 = pneg %p113
        $region14: #{tpu_custom_call.1} parent=11 // pred_check_branch
          %242 = sbr.rel (%p240) target = $region16
        $region15: #{tpu_custom_call.1} parent=11 // pred_region
          %s244 = ssub.s32 128, 128
          %245 = vsyncadd [#allocation6], %s244
          %s247 = sshll.u32 [#allocation7], 4
          %s248 = int_to_ptr.vmem [resolvable:$true] %s247
          %250 = dma.hbm_to_vmem [thread:$0]  %s2, 128, %s248, [#allocation6]
        $region16: #{tpu_custom_call.1} parent=11 // pred_fallthru
          _
        // Predicated region
        $region17: #{tpu_custom_call.1} parent=11 // pred_check
          %p251 = pneg %p134
        $region18: #{tpu_custom_call.1} parent=11 // pred_check_branch
          %253 = sbr.rel (%p251) target = $region20
        $region19: #{tpu_custom_call.1} parent=11 // pred_region
          %s255 = ssub.s32 128, 128
          %256 = vsyncadd [#allocation9], %s255
          %s258 = sshll.u32 [#allocation8], 4
          %s259 = int_to_ptr.vmem [resolvable:$true] %s258
          %261 = dma.hbm_to_vmem [thread:$0]  %s3, 128, %s259, [#allocation9]
        $region20: #{tpu_custom_call.1} parent=11 // pred_fallthru
          _
        // Predicated region
        $region21: #{tpu_custom_call.1} parent=11 // pred_check
          %p262 = pneg %p155
        $region22: #{tpu_custom_call.1} parent=11 // pred_check_branch
          %264 = sbr.rel (%p262) target = $region24
        $region23: #{tpu_custom_call.1} parent=11 // pred_region
          %s266 = ssub.s32 1024, 1024
          %267 = vsyncadd [#allocation9], %s266
          %s268 = sshll.u32 [#allocation10], 4
          %s269 = int_to_ptr.vmem [resolvable:$true] %s268
          %274 = dma.hbm_to_vmem [thread:$0]  %s4, 1024, %s269, [#allocation9], 64, 64, 4
        $region24: #{tpu_custom_call.1} parent=11 // pred_fallthru
          _
        // Predicated region
        $region25: #{tpu_custom_call.1} parent=11 // pred_check
          %p275 = pneg %p176
        $region26: #{tpu_custom_call.1} parent=11 // pred_check_branch
          %277 = sbr.rel (%p275) target = $region28
        $region27: #{tpu_custom_call.1} parent=11 // pred_region
          %s279 = ssub.s32 3072, 3072
          %280 = vsyncadd [#allocation12], %s279
          %s281 = sshll.u32 [#allocation11], 4
          %s282 = int_to_ptr.vmem [resolvable:$true] %s281
          %287 = dma.hbm_to_vmem [thread:$0]  %s5, 3072, %s282, [#allocation12], 64, 64, 4
        $region28: #{tpu_custom_call.1} parent=11 // pred_fallthru
          _
        // Predicated region
        $region29: #{tpu_custom_call.1} parent=11 // pred_check
          %p288 = pneg %p197
        $region30: #{tpu_custom_call.1} parent=11 // pred_check_branch
          %290 = sbr.rel (%p288) target = $region32
        $region31: #{tpu_custom_call.1} parent=11 // pred_region
          %s292 = ssub.s32 1024, 1024
          %293 = vsyncadd [#allocation12], %s292
          %s294 = sshll.u32 [#allocation13], 4
          %s295 = int_to_ptr.vmem [resolvable:$true] %s294
          %300 = dma.hbm_to_vmem [thread:$0]  %s6, 1024, %s295, [#allocation12], 64, 64, 4
        $region32: #{tpu_custom_call.1} parent=11 // pred_fallthru
          _
      $region12: #{tpu_custom_call.1} parent=5 // pred_fallthru
        _
      %p301 = scmp.lt.s32.totalorder %s24, 4
      // Predicated region
      $region33: #{tpu_custom_call.1} parent=5 // pred_check
        %p302 = pneg %p301
      $region34: #{tpu_custom_call.1} parent=5 // pred_check_branch
        %304 = sbr.rel (%p302) target = $region36
      $region35: #{tpu_custom_call.1} parent=5 // pred_region
        // Predicated region
        $region37: #{tpu_custom_call.1} parent=35 // pred_check
          %p305 = pneg %p58
        $region38: #{tpu_custom_call.1} parent=35 // pred_check_branch
          %307 = sbr.rel (%p305) target = $region40
        $region39: #{tpu_custom_call.1} parent=35 // pred_region
          %s308 = sand.u32 %s48, 1
          %s309 = scalar_lea.sflag [#allocation3], %s308
          %s310 = sand.u32 %s48, 1
          %s311 = smul.addr %s310, 8
          %s312 = scalar_lea.vmem [#allocation2], %s311
          %s313 = smul.u32 2, %s32
          %s315 = ssub.s32 128, 128
          %316 = vsyncadd %s309, %s315
          %s317 = smul.addr %s31, 4
          %s318 = sadd.s32 %s313, %s317
          %s319 = smul.addr %s318, 64
          %s320 = scalar_lea.hbm %s0, %s319
          %s321 = sshll.u32 %s312, 4
          %s322 = int_to_ptr.vmem [resolvable:$true] %s321
          %327 = dma.hbm_to_vmem [thread:$0]  %s320, 128, %s322, %s309, 64, 64, 4
        $region40: #{tpu_custom_call.1} parent=35 // pred_fallthru
          _
        // Predicated region
        $region41: #{tpu_custom_call.1} parent=35 // pred_check
          %p328 = pneg %p86
        $region42: #{tpu_custom_call.1} parent=35 // pred_check_branch
          %330 = sbr.rel (%p328) target = $region44
        $region43: #{tpu_custom_call.1} parent=35 // pred_region
          %s331 = sand.u32 %s24, 1
          %s332 = scalar_lea.sflag [#allocation6], %s331
          %s333 = sand.u32 %s76, 1
          %s334 = scalar_lea.vmem [#allocation5], %s333
          %s336 = ssub.s32 16, 16
          %337 = vsyncadd %s332, %s336
          %s338 = smul.addr %s31, 2
          %s339 = sadd.s32 %s32, %s338
          %s340 = smul.addr %s339, 16
          %s341 = scalar_lea.hbm %s1, %s340
          %s343 = sshll.u32 %s334, 4
          %s344 = int_to_ptr.vmem [resolvable:$true] %s343
          %346 = dma.hbm_to_vmem [thread:$0]  %s341, 16, %s344, %s332
        $region44: #{tpu_custom_call.1} parent=35 // pred_fallthru
          _
      $region36: #{tpu_custom_call.1} parent=5 // pred_fallthru
        _
      %p347 = scmp.le.s32.totalorder 1, %s24
      %p348 = scmp.lt.s32.totalorder %s24, 5
      %p349 = pnand %p347, %p348
      %p350 = pneg %p349
      // Predicated region
      $region45: #{tpu_custom_call.1} parent=5 // pred_check
        _
      $region46: #{tpu_custom_call.1} parent=5 // pred_check_branch
        %352 = sbr.rel (%p349) target = $region48
      $region47: #{tpu_custom_call.1} parent=5 // pred_region
        %s353 = ssub.s32 %s24, 1
        %s354 = sand.u32 %s51, 1
        %s355 = scalar_lea.sflag [#allocation3], %s354
        %s356 = sand.u32 %s51, 1
        %s357 = smul.addr %s356, 8
        %s358 = scalar_lea.vmem [#allocation2], %s357
        // Predicated region
        $region49: #{tpu_custom_call.1} parent=47 // pred_check
          %p359 = pneg %p64
        $region50: #{tpu_custom_call.1} parent=47 // pred_check_branch
          %361 = sbr.rel (%p359) target = $region52
        $region51: #{tpu_custom_call.1} parent=47 // pred_region
          %362 = dma.done %s355, 128
        $region52: #{tpu_custom_call.1} parent=47 // pred_fallthru
          _
        %s363 = sand.u32 %s29, 1
        %s364 = scalar_lea.sflag [#allocation6], %s363
        %s365 = sand.u32 %s79, 1
        %s366 = scalar_lea.vmem [#allocation5], %s365
        // Predicated region
        $region53: #{tpu_custom_call.1} parent=47 // pred_check
          %p367 = pneg %p92
        $region54: #{tpu_custom_call.1} parent=47 // pred_check_branch
          %369 = sbr.rel (%p367) target = $region56
        $region55: #{tpu_custom_call.1} parent=47 // pred_region
          %370 = dma.done %s364, 16
        $region56: #{tpu_custom_call.1} parent=47 // pred_fallthru
          _
        // Predicated region
        $region57: #{tpu_custom_call.1} parent=47 // pred_check
          %p371 = pneg %p113
        $region58: #{tpu_custom_call.1} parent=47 // pred_check_branch
          %373 = sbr.rel (%p371) target = $region60
        $region59: #{tpu_custom_call.1} parent=47 // pred_region
          %374 = dma.done [#allocation6], 128
        $region60: #{tpu_custom_call.1} parent=47 // pred_fallthru
          _
        // Predicated region
        $region61: #{tpu_custom_call.1} parent=47 // pred_check
          %p375 = pneg %p134
        $region62: #{tpu_custom_call.1} parent=47 // pred_check_branch
          %377 = sbr.rel (%p375) target = $region64
        $region63: #{tpu_custom_call.1} parent=47 // pred_region
          %378 = dma.done [#allocation9], 128
        $region64: #{tpu_custom_call.1} parent=47 // pred_fallthru
          _
        // Predicated region
        $region65: #{tpu_custom_call.1} parent=47 // pred_check
          %p379 = pneg %p155
        $region66: #{tpu_custom_call.1} parent=47 // pred_check_branch
          %381 = sbr.rel (%p379) target = $region68
        $region67: #{tpu_custom_call.1} parent=47 // pred_region
          %382 = dma.done [#allocation9], 1024
        $region68: #{tpu_custom_call.1} parent=47 // pred_fallthru
          _
        // Predicated region
        $region69: #{tpu_custom_call.1} parent=47 // pred_check
          %p383 = pneg %p176
        $region70: #{tpu_custom_call.1} parent=47 // pred_check_branch
          %385 = sbr.rel (%p383) target = $region72
        $region71: #{tpu_custom_call.1} parent=47 // pred_region
          %386 = dma.done [#allocation12], 3072
        $region72: #{tpu_custom_call.1} parent=47 // pred_fallthru
          _
        // Predicated region
        $region73: #{tpu_custom_call.1} parent=47 // pred_check
          %p387 = pneg %p197
        $region74: #{tpu_custom_call.1} parent=47 // pred_check_branch
          %389 = sbr.rel (%p387) target = $region76
        $region75: #{tpu_custom_call.1} parent=47 // pred_region
          %390 = dma.done [#allocation12], 1024
        $region76: #{tpu_custom_call.1} parent=47 // pred_fallthru
          _
        %s391 = sand.u32 %s51, 1
        %s392 = scalar_lea.sflag [#allocation3], %s391
        %s393 = sand.u32 %s51, 1
        %s394 = smul.addr %s393, 8
        %s395 = scalar_lea.vmem [#allocation2], %s394
        %p396 = pneg %p64
        %p397 = pneg %p61
        %s398 = sand.u32 %s29, 1
        %s399 = scalar_lea.sflag [#allocation6], %s398
        %s400 = sand.u32 %s79, 1
        %s401 = scalar_lea.vmem [#allocation5], %s400
        %p402 = pneg %p92
        %p403 = pneg %p89
        %p404 = pneg %p113
        %p405 = pneg %p110
        %p406 = pneg %p134
        %p407 = pneg %p131
        %p408 = pneg %p155
        %p409 = pneg %p152
        %p410 = pneg %p176
        %p411 = pneg %p173
        %p412 = pneg %p197
        %p413 = pneg %p194
        %p414 = pneg %p225
        %p415 = pneg %p222
        %s416 = sand.u32 %s212, 1
        %s417 = scalar_lea.sflag [#allocation4], %s416
        %s418 = sand.u32 %s212, 1
        %s419 = smul.addr %s418, 16
        %s420 = scalar_lea.vmem [#allocation14], %s419
        %s421 = smul.u32 2, %s34
        %s422 = smul.u32 2, %s34
        %s424 = smul.u32 %s34, 16
        %v425 = vld [vmem:[#allocation7] sm:$0x1]
        %v426 = vld [vmem:[#allocation7 + $0x1] sm:$0x1]
        %v427 = vld [vmem:[#allocation7 + $0x2] sm:$0x1]
        %v428 = vld [vmem:[#allocation8] sm:$0x1]
        %v429 = vld [vmem:[#allocation8 + $0x1] sm:$0x1]
        %v430 = vld [vmem:[#allocation8 + $0x2] sm:$0x1]
        %v431 = vld [vmem:[#allocation8 + $0x3] sm:$0x1]
        %v432 = vld [vmem:[%s358] sm:$0xf]
        %v433 = vld [vmem:[%s358 + $0x4] sm:$0xf]
        %v434 = vld [vmem:[%s366] sm:$0x1]
        %v437 = vunpack.c.l.b16 %v432
        %v438 = vunpack.c.l.b16 %v433
        %v439 = vpack.c.b16 %v438, %v437
        %v441 = vunpack.c.l.bf16 %v439
        %v442 = vunpack.c.h.bf16 %v439
        %v443 = vunpack.c.l.bf16 %v434
        %v444 = vlaneseq
        %v445 = vshrl.u32 %v444, 7
        %v446 = vsub.s32 0, %v445
        %v447 = vrot.slane %v425, %v446
        %v448 = vmul.f32 %v441, %v447
        %v449 = vmul.f32 %v442, %v447
        %v450 = vmul.f32 %v443, %v447
        %v451 = vlaneseq
        %v452 = vshrl.u32 %v451, 7
        %v453 = vsub.s32 0, %v452
        %v454 = vrot.slane %v426, %v453
        %v455 = vadd.f32 %v448, %v454
        %v456 = vadd.f32 %v449, %v454
        %v457 = vadd.f32 %v450, %v454
        %v458 = vmax.f32 %v455, 0.0
        %v459 = vmax.f32 %v456, 0.0
        %v460 = vmax.f32 %v457, 0.0
        %v461 = vpack.c.bf16 %v459, %v458
        %v462 = vpack.c.bf16 %v460, %v460
        %v463 = vld [vmem:[#allocation10] sm:$0xf]
        %v464 = vld [vmem:[#allocation10 + $0x4] sm:$0xf]
        %v465 = vld [vmem:[#allocation10 + $0x8] sm:$0xf]
        %v466 = vld [vmem:[#allocation10 + $0xc] sm:$0xf]
        %v467 = vld [vmem:[#allocation10 + $0x10] sm:$0xf]
        %v468 = vld [vmem:[#allocation10 + $0x14] sm:$0xf]
        %v469 = vld [vmem:[#allocation10 + $0x18] sm:$0xf]
        %v470 = vld [vmem:[#allocation10 + $0x1c] sm:$0xf]
        %v471 = vld [vmem:[#allocation10 + $0x20] sm:$0xf]
        %v472 = vld [vmem:[#allocation10 + $0x24] sm:$0xf]
        %v473 = vld [vmem:[#allocation10 + $0x28] sm:$0xf]
        %v474 = vld [vmem:[#allocation10 + $0x2c] sm:$0xf]
        %v475 = vld [vmem:[#allocation10 + $0x30] sm:$0xf]
        %v476 = vld [vmem:[#allocation10 + $0x34] sm:$0xf]
        %v477 = vld [vmem:[#allocation10 + $0x38] sm:$0xf]
        %v478 = vld [vmem:[#allocation10 + $0x3c] sm:$0xf]
        %v495 = vunpack.c.l.b16 %v463
        %v496 = vunpack.c.l.b16 %v464
        %v497 = vunpack.c.l.b16 %v465
        %v498 = vunpack.c.l.b16 %v466
        %v499 = vunpack.c.l.b16 %v467
        %v500 = vunpack.c.l.b16 %v468
        %v501 = vunpack.c.l.b16 %v469
        %v502 = vunpack.c.l.b16 %v470
        %v503 = vunpack.c.l.b16 %v471
        %v504 = vunpack.c.l.b16 %v472
        %v505 = vunpack.c.l.b16 %v473
        %v506 = vunpack.c.l.b16 %v474
        %v507 = vunpack.c.l.b16 %v475
        %v508 = vunpack.c.l.b16 %v476
        %v509 = vunpack.c.l.b16 %v477
        %v510 = vunpack.c.l.b16 %v478
        %v511 = vpack.c.b16 %v496, %v495
        %v512 = vpack.c.b16 %v498, %v497
        %v513 = vpack.c.b16 %v500, %v499
        %v514 = vpack.c.b16 %v502, %v501
        %v515 = vpack.c.b16 %v504, %v503
        %v516 = vpack.c.b16 %v506, %v505
        %v517 = vpack.c.b16 %v508, %v507
        %v518 = vpack.c.b16 %v510, %v509
        %527 = vmatprep.subr.bf16.mxu0 0
        %528 = vmatpush1.bf16.msra.mxu0 %v518
        %529 = vmatprep.subr.bf16.mxu0 0
        %530 = vmatpush1.bf16.msra.mxu0 %v517
        %531 = vmatprep.subr.bf16.mxu0 0
        %532 = vmatpush1.bf16.msra.mxu0 %v516
        %533 = vmatprep.subr.bf16.mxu0 0
        %534 = vmatpush1.bf16.msra.mxu0 %v515
        %535 = vmatprep.subr.bf16.mxu0 0
        %536 = vmatpush1.bf16.msra.mxu0 %v514
        %537 = vmatprep.subr.bf16.mxu0 0
        %538 = vmatpush1.bf16.msra.mxu0 %v513
        %539 = vmatprep.subr.bf16.mxu0 0
        %540 = vmatpush1.bf16.msra.mxu0 %v512
        %541 = vmatprep.subr.bf16.mxu0 0
        %542 = vmatpush1.bf16.msra.mxu0 %v511
        %543 = vmatprep.subr.bf16.mxu0 0
        %544 = vmatpush2.bf16.msra.mxu0 0
        %545 = vmatprep.subr.bf16.mxu0 0
        %546 = vmatpush2.bf16.msra.mxu0 0
        %547 = vmatprep.subr.bf16.mxu0 0
        %548 = vmatpush2.bf16.msra.mxu0 0
        %549 = vmatprep.subr.bf16.mxu0 0
        %550 = vmatpush2.bf16.msra.mxu0 0
        %551 = vmatprep.subr.bf16.mxu0 0
        %552 = vmatpush2.bf16.msra.mxu0 0
        %553 = vmatprep.subr.bf16.mxu0 0
        %554 = vmatpush2.bf16.msra.mxu0 0
        %555 = vmatprep.subr.bf16.mxu0 0
        %556 = vmatpush2.bf16.msra.mxu0 0
        %557 = vmatprep.subr.bf16.mxu0 0
        %558 = vmatpush2.bf16.msra.mxu0 0
        %559 = vmatprep.mubr.bf16.mxu0 0
        %560 = vmatmul.mubr.bf16.gmra.mxu0 %v461
        %v561 = vpop.f32.mrf.mxu0
        %v562 = vadd.f32 0.0, %v561
        %v563 = vpop.f32.mrf.mxu0
        %v564 = vpop.f32.mrf.mxu0
        %v565 = vadd.f32 0.0, %v564
        %v566 = vpop.f32.mrf.mxu0
        %567 = vmatprep.mubr.bf16.mxu0 0
        %568 = vmatmul.mubr.bf16.gmra.mxu0 %v462
        %v569 = vpop.f32.mrf.mxu0
        %v570 = vadd.f32 0.0, %v569
        %v571 = vpop.f32.mrf.mxu0
        %v572 = vpop.f32.mrf.mxu0
        %v573 = vpop.f32.mrf.mxu0
        %574 = vdwg.mxu0
        %v575 = vlaneseq
        %v576 = vshrl.u32 %v575, 7
        %v577 = vsub.s32 0, %v576
        %v578 = vrot.slane %v428, %v577
        %v579 = vmul.f32 %v562, %v578
        %v580 = vmul.f32 %v565, %v578
        %v581 = vmul.f32 %v570, %v578
        %v582 = vlaneseq
        %v583 = vshrl.u32 %v582, 7
        %v584 = vsub.s32 0, %v583
        %v585 = vrot.slane %v429, %v584
        %v586 = vadd.f32 %v579, %v585
        %v587 = vadd.f32 %v580, %v585
        %v588 = vadd.f32 %v581, %v585
        %v589 = vmax.f32 %v586, 0.0
        %v590 = vmax.f32 %v587, 0.0
        %v591 = vmax.f32 %v588, 0.0
        %v592 = vlaneseq
        %v593 = vshrl.u32 %v592, 7
        %v594 = vadd.s32 %v593, 8
        %v595 = vstv %s424
        %v596 = vadd.s32 %v593, %v595
        %v597 = vadd.s32 %v594, %v595
        %vm598 = vcmp.lt.s32.totalorder %v596, 20
        %vm599 = vcmp.lt.s32.totalorder %v597, 20
        %v600 = vsel %vm598, 1, 0
        %v601 = vsel %vm599, 1, 0
        %vm602 = vcmp.eq.s32.totalorder %v600, 1
        %vm603 = vcmp.eq.s32.totalorder %v601, 1
        %v604 = vsel %vm602, %v589, 0.0
        %v605 = vsel %vm603, %v590, 0.0
        %p606 = scmp.gt.s32.totalorder %s424, 0
        %s607 = scalar_select %p606, 1.0, 0.0
        %v608 = vstv %s607
        %v609 = vmul.f32 %v591, %v608
        %s610 = sadd.s32 %s424, 16
        %p611 = scmp.lt.s32.totalorder %s610, 20
        %s612 = scalar_select %p611, 1.0, 0.0
        %v613 = vstv %s612
        %v614 = vmul.f32 %v591, %v613
        %vm615 = vcmp.eq.s32.totalorder %v593, 0
        %vm616 = vcmp.eq.s32.totalorder %v594, 0
        %v617 = vrot.slane %v604, 7
        %v618 = vrot.slane %v605, 7
        %vm619 = vcmp.lt.s32.totalorder %v593, 1
        %v620 = vsel %vm619, %v617, %v618
        %v621 = vsel %vm619, %v618, %v617
        %v622 = vsel %vm615, 1, 0
        %v623 = vsel %vm616, 1, 0
        %vm624 = vcmp.eq.s32.totalorder %v622, 1
        %vm625 = vcmp.eq.s32.totalorder %v623, 1
        %v626 = vlaneseq
        %v627 = vshrl.u32 %v626, 7
        %v628 = vsub.s32 0, %v627
        %v629 = vrot.slane %v609, %v628
        %v630 = vsel %vm624, %v629, %v621
        %v631 = vsel %vm625, %v629, %v620
        %vm632 = vcmp.eq.s32.totalorder %v593, 15
        %vm633 = vcmp.eq.s32.totalorder %v594, 15
        %v634 = vrot.slane %v604, 1
        %v635 = vrot.slane %v605, 1
        %vm636 = vcmp.lt.s32.totalorder %v593, 7
        %v637 = vsel %vm636, %v634, %v635
        %v638 = vsel %vm636, %v635, %v634
        %v639 = vsel %vm632, 1, 0
        %v640 = vsel %vm633, 1, 0
        %vm641 = vcmp.eq.s32.totalorder %v639, 1
        %vm642 = vcmp.eq.s32.totalorder %v640, 1
        %v643 = vlaneseq
        %v644 = vshrl.u32 %v643, 7
        %v645 = vsub.s32 1, %v644
        %v646 = vrot.slane %v614, %v645
        %v647 = vsel %vm641, %v646, %v637
        %v648 = vsel %vm642, %v646, %v638
        %v649 = vpack.c.bf16 %v631, %v630
        %v650 = vld [vmem:[#allocation11] sm:$0xf]
        %v651 = vld [vmem:[#allocation11 + $0x4] sm:$0xf]
        %v652 = vld [vmem:[#allocation11 + $0x8] sm:$0xf]
        %v653 = vld [vmem:[#allocation11 + $0xc] sm:$0xf]
        %v654 = vld [vmem:[#allocation11 + $0x10] sm:$0xf]
        %v655 = vld [vmem:[#allocation11 + $0x14] sm:$0xf]
        %v656 = vld [vmem:[#allocation11 + $0x18] sm:$0xf]
        %v657 = vld [vmem:[#allocation11 + $0x1c] sm:$0xf]
        %v658 = vld [vmem:[#allocation11 + $0x20] sm:$0xf]
        %v659 = vld [vmem:[#allocation11 + $0x24] sm:$0xf]
        %v660 = vld [vmem:[#allocation11 + $0x28] sm:$0xf]
        %v661 = vld [vmem:[#allocation11 + $0x2c] sm:$0xf]
        %v662 = vld [vmem:[#allocation11 + $0x30] sm:$0xf]
        %v663 = vld [vmem:[#allocation11 + $0x34] sm:$0xf]
        %v664 = vld [vmem:[#allocation11 + $0x38] sm:$0xf]
        %v665 = vld [vmem:[#allocation11 + $0x3c] sm:$0xf]
        %v666 = vpack.c.bf16 %v605, %v604
        %s667 = scalar_lea.vmem [#allocation11], 64
        %v668 = vld [vmem:[%s667] sm:$0xf]
        %v669 = vld [vmem:[%s667 + $0x4] sm:$0xf]
        %v670 = vld [vmem:[%s667 + $0x8] sm:$0xf]
        %v671 = vld [vmem:[%s667 + $0xc] sm:$0xf]
        %v672 = vld [vmem:[%s667 + $0x10] sm:$0xf]
        %v673 = vld [vmem:[%s667 + $0x14] sm:$0xf]
        %v674 = vld [vmem:[%s667 + $0x18] sm:$0xf]
        %v675 = vld [vmem:[%s667 + $0x1c] sm:$0xf]
        %v676 = vld [vmem:[%s667 + $0x20] sm:$0xf]
        %v677 = vld [vmem:[%s667 + $0x24] sm:$0xf]
        %v678 = vld [vmem:[%s667 + $0x28] sm:$0xf]
        %v679 = vld [vmem:[%s667 + $0x2c] sm:$0xf]
        %v680 = vld [vmem:[%s667 + $0x30] sm:$0xf]
        %v681 = vld [vmem:[%s667 + $0x34] sm:$0xf]
        %v682 = vld [vmem:[%s667 + $0x38] sm:$0xf]
        %v683 = vld [vmem:[%s667 + $0x3c] sm:$0xf]
        %v700 = vunpack.c.l.b16 %v668
        %v701 = vunpack.c.l.b16 %v669
        %v702 = vunpack.c.l.b16 %v670
        %v703 = vunpack.c.l.b16 %v671
        %v704 = vunpack.c.l.b16 %v672
        %v705 = vunpack.c.l.b16 %v673
        %v706 = vunpack.c.l.b16 %v674
        %v707 = vunpack.c.l.b16 %v675
        %v708 = vunpack.c.l.b16 %v676
        %v709 = vunpack.c.l.b16 %v677
        %v710 = vunpack.c.l.b16 %v678
        %v711 = vunpack.c.l.b16 %v679
        %v712 = vunpack.c.l.b16 %v680
        %v713 = vunpack.c.l.b16 %v681
        %v714 = vunpack.c.l.b16 %v682
        %v715 = vunpack.c.l.b16 %v683
        %v716 = vpack.c.b16 %v701, %v700
        %v717 = vpack.c.b16 %v703, %v702
        %v718 = vpack.c.b16 %v705, %v704
        %v719 = vpack.c.b16 %v707, %v706
        %v720 = vpack.c.b16 %v709, %v708
        %v721 = vpack.c.b16 %v711, %v710
        %v722 = vpack.c.b16 %v713, %v712
        %v723 = vpack.c.b16 %v715, %v714
        %732 = vmatprep.subr.bf16.mxu0 0
        %733 = vmatpush1.bf16.msra.mxu0 %v723
        %734 = vmatprep.subr.bf16.mxu0 0
        %735 = vmatpush1.bf16.msra.mxu0 %v722
        %736 = vmatprep.subr.bf16.mxu0 0
        %737 = vmatpush1.bf16.msra.mxu0 %v721
        %738 = vmatprep.subr.bf16.mxu0 0
        %739 = vmatpush1.bf16.msra.mxu0 %v720
        %740 = vmatprep.subr.bf16.mxu0 0
        %741 = vmatpush1.bf16.msra.mxu0 %v719
        %742 = vmatprep.subr.bf16.mxu0 0
        %743 = vmatpush1.bf16.msra.mxu0 %v718
        %744 = vmatprep.subr.bf16.mxu0 0
        %745 = vmatpush1.bf16.msra.mxu0 %v717
        %746 = vmatprep.subr.bf16.mxu0 0
        %747 = vmatpush1.bf16.msra.mxu0 %v716
        %748 = vmatprep.subr.bf16.mxu0 0
        %749 = vmatpush2.bf16.msra.mxu0 0
        %750 = vmatprep.subr.bf16.mxu0 0
        %751 = vmatpush2.bf16.msra.mxu0 0
        %752 = vmatprep.subr.bf16.mxu0 0
        %753 = vmatpush2.bf16.msra.mxu0 0
        %754 = vmatprep.subr.bf16.mxu0 0
        %755 = vmatpush2.bf16.msra.mxu0 0
        %756 = vmatprep.subr.bf16.mxu0 0
        %757 = vmatpush2.bf16.msra.mxu0 0
        %758 = vmatprep.subr.bf16.mxu0 0
        %759 = vmatpush2.bf16.msra.mxu0 0
        %760 = vmatprep.subr.bf16.mxu0 0
        %761 = vmatpush2.bf16.msra.mxu0 0
        %762 = vmatprep.subr.bf16.mxu0 0
        %763 = vmatpush2.bf16.msra.mxu0 0
        %764 = vmatprep.mubr.bf16.mxu0 0
        %765 = vmatmul.mubr.bf16.gmra.mxu0 %v666
        %v766 = vpop.f32.mrf.mxu0
        %v767 = vadd.f32 0.0, %v766
        %v768 = vpop.f32.mrf.mxu0
        %v769 = vpop.f32.mrf.mxu0
        %v770 = vadd.f32 0.0, %v769
        %v771 = vpop.f32.mrf.mxu0
        %772 = vdwg.mxu0
        %v789 = vunpack.c.l.b16 %v650
        %v790 = vunpack.c.l.b16 %v651
        %v791 = vunpack.c.l.b16 %v652
        %v792 = vunpack.c.l.b16 %v653
        %v793 = vunpack.c.l.b16 %v654
        %v794 = vunpack.c.l.b16 %v655
        %v795 = vunpack.c.l.b16 %v656
        %v796 = vunpack.c.l.b16 %v657
        %v797 = vunpack.c.l.b16 %v658
        %v798 = vunpack.c.l.b16 %v659
        %v799 = vunpack.c.l.b16 %v660
        %v800 = vunpack.c.l.b16 %v661
        %v801 = vunpack.c.l.b16 %v662
        %v802 = vunpack.c.l.b16 %v663
        %v803 = vunpack.c.l.b16 %v664
        %v804 = vunpack.c.l.b16 %v665
        %v805 = vpack.c.b16 %v790, %v789
        %v806 = vpack.c.b16 %v792, %v791
        %v807 = vpack.c.b16 %v794, %v793
        %v808 = vpack.c.b16 %v796, %v795
        %v809 = vpack.c.b16 %v798, %v797
        %v810 = vpack.c.b16 %v800, %v799
        %v811 = vpack.c.b16 %v802, %v801
        %v812 = vpack.c.b16 %v804, %v803
        %821 = vmatprep.subr.bf16.mxu0 0
        %822 = vmatpush1.bf16.msra.mxu0 %v812
        %823 = vmatprep.subr.bf16.mxu0 0
        %824 = vmatpush1.bf16.msra.mxu0 %v811
        %825 = vmatprep.subr.bf16.mxu0 0
        %826 = vmatpush1.bf16.msra.mxu0 %v810
        %827 = vmatprep.subr.bf16.mxu0 0
        %828 = vmatpush1.bf16.msra.mxu0 %v809
        %829 = vmatprep.subr.bf16.mxu0 0
        %830 = vmatpush1.bf16.msra.mxu0 %v808
        %831 = vmatprep.subr.bf16.mxu0 0
        %832 = vmatpush1.bf16.msra.mxu0 %v807
        %833 = vmatprep.subr.bf16.mxu0 0
        %834 = vmatpush1.bf16.msra.mxu0 %v806
        %835 = vmatprep.subr.bf16.mxu0 0
        %836 = vmatpush1.bf16.msra.mxu0 %v805
        %837 = vmatprep.subr.bf16.mxu0 0
        %838 = vmatpush2.bf16.msra.mxu0 0
        %839 = vmatprep.subr.bf16.mxu0 0
        %840 = vmatpush2.bf16.msra.mxu0 0
        %841 = vmatprep.subr.bf16.mxu0 0
        %842 = vmatpush2.bf16.msra.mxu0 0
        %843 = vmatprep.subr.bf16.mxu0 0
        %844 = vmatpush2.bf16.msra.mxu0 0
        %845 = vmatprep.subr.bf16.mxu0 0
        %846 = vmatpush2.bf16.msra.mxu0 0
        %847 = vmatprep.subr.bf16.mxu0 0
        %848 = vmatpush2.bf16.msra.mxu0 0
        %849 = vmatprep.subr.bf16.mxu0 0
        %850 = vmatpush2.bf16.msra.mxu0 0
        %851 = vmatprep.subr.bf16.mxu0 0
        %852 = vmatpush2.bf16.msra.mxu0 0
        %853 = vmatprep.mubr.bf16.mxu0 0
        %854 = vmatmul.mubr.bf16.gmra.mxu0 %v649
        %v855 = vpop.f32.mrf.mxu0
        %v856 = vadd.f32 %v767, %v855
        %v857 = vpop.f32.mrf.mxu0
        %v858 = vpop.f32.mrf.mxu0
        %v859 = vadd.f32 %v770, %v858
        %v860 = vpop.f32.mrf.mxu0
        %861 = vdwg.mxu0
        %v862 = vpack.c.bf16 %v648, %v647
        %s863 = scalar_lea.vmem [#allocation11], 128
        %v864 = vld [vmem:[%s863] sm:$0xf]
        %v865 = vld [vmem:[%s863 + $0x4] sm:$0xf]
        %v866 = vld [vmem:[%s863 + $0x8] sm:$0xf]
        %v867 = vld [vmem:[%s863 + $0xc] sm:$0xf]
        %v868 = vld [vmem:[%s863 + $0x10] sm:$0xf]
        %v869 = vld [vmem:[%s863 + $0x14] sm:$0xf]
        %v870 = vld [vmem:[%s863 + $0x18] sm:$0xf]
        %v871 = vld [vmem:[%s863 + $0x1c] sm:$0xf]
        %v872 = vld [vmem:[%s863 + $0x20] sm:$0xf]
        %v873 = vld [vmem:[%s863 + $0x24] sm:$0xf]
        %v874 = vld [vmem:[%s863 + $0x28] sm:$0xf]
        %v875 = vld [vmem:[%s863 + $0x2c] sm:$0xf]
        %v876 = vld [vmem:[%s863 + $0x30] sm:$0xf]
        %v877 = vld [vmem:[%s863 + $0x34] sm:$0xf]
        %v878 = vld [vmem:[%s863 + $0x38] sm:$0xf]
        %v879 = vld [vmem:[%s863 + $0x3c] sm:$0xf]
        %v896 = vunpack.c.l.b16 %v864
        %v897 = vunpack.c.l.b16 %v865
        %v898 = vunpack.c.l.b16 %v866
        %v899 = vunpack.c.l.b16 %v867
        %v900 = vunpack.c.l.b16 %v868
        %v901 = vunpack.c.l.b16 %v869
        %v902 = vunpack.c.l.b16 %v870
        %v903 = vunpack.c.l.b16 %v871
        %v904 = vunpack.c.l.b16 %v872
        %v905 = vunpack.c.l.b16 %v873
        %v906 = vunpack.c.l.b16 %v874
        %v907 = vunpack.c.l.b16 %v875
        %v908 = vunpack.c.l.b16 %v876
        %v909 = vunpack.c.l.b16 %v877
        %v910 = vunpack.c.l.b16 %v878
        %v911 = vunpack.c.l.b16 %v879
        %v912 = vpack.c.b16 %v897, %v896
        %v913 = vpack.c.b16 %v899, %v898
        %v914 = vpack.c.b16 %v901, %v900
        %v915 = vpack.c.b16 %v903, %v902
        %v916 = vpack.c.b16 %v905, %v904
        %v917 = vpack.c.b16 %v907, %v906
        %v918 = vpack.c.b16 %v909, %v908
        %v919 = vpack.c.b16 %v911, %v910
        %928 = vmatprep.subr.bf16.mxu0 0
        %929 = vmatpush1.bf16.msra.mxu0 %v919
        %930 = vmatprep.subr.bf16.mxu0 0
        %931 = vmatpush1.bf16.msra.mxu0 %v918
        %932 = vmatprep.subr.bf16.mxu0 0
        %933 = vmatpush1.bf16.msra.mxu0 %v917
        %934 = vmatprep.subr.bf16.mxu0 0
        %935 = vmatpush1.bf16.msra.mxu0 %v916
        %936 = vmatprep.subr.bf16.mxu0 0
        %937 = vmatpush1.bf16.msra.mxu0 %v915
        %938 = vmatprep.subr.bf16.mxu0 0
        %939 = vmatpush1.bf16.msra.mxu0 %v914
        %940 = vmatprep.subr.bf16.mxu0 0
        %941 = vmatpush1.bf16.msra.mxu0 %v913
        %942 = vmatprep.subr.bf16.mxu0 0
        %943 = vmatpush1.bf16.msra.mxu0 %v912
        %944 = vmatprep.subr.bf16.mxu0 0
        %945 = vmatpush2.bf16.msra.mxu0 0
        %946 = vmatprep.subr.bf16.mxu0 0
        %947 = vmatpush2.bf16.msra.mxu0 0
        %948 = vmatprep.subr.bf16.mxu0 0
        %949 = vmatpush2.bf16.msra.mxu0 0
        %950 = vmatprep.subr.bf16.mxu0 0
        %951 = vmatpush2.bf16.msra.mxu0 0
        %952 = vmatprep.subr.bf16.mxu0 0
        %953 = vmatpush2.bf16.msra.mxu0 0
        %954 = vmatprep.subr.bf16.mxu0 0
        %955 = vmatpush2.bf16.msra.mxu0 0
        %956 = vmatprep.subr.bf16.mxu0 0
        %957 = vmatpush2.bf16.msra.mxu0 0
        %958 = vmatprep.subr.bf16.mxu0 0
        %959 = vmatpush2.bf16.msra.mxu0 0
        %960 = vmatprep.mubr.bf16.mxu0 0
        %961 = vmatmul.mubr.bf16.gmra.mxu0 %v862
        %v962 = vpop.f32.mrf.mxu0
        %v963 = vadd.f32 0.0, %v962
        %v964 = vpop.f32.mrf.mxu0
        %v965 = vpop.f32.mrf.mxu0
        %v966 = vadd.f32 0.0, %v965
        %v967 = vpop.f32.mrf.mxu0
        %968 = vdwg.mxu0
        %v969 = vadd.f32 %v856, %v963
        %v970 = vadd.f32 %v859, %v966
        %v971 = vlaneseq
        %v972 = vshrl.u32 %v971, 7
        %v973 = vsub.s32 0, %v972
        %v974 = vrot.slane %v430, %v973
        %v975 = vmul.f32 %v969, %v974
        %v976 = vmul.f32 %v970, %v974
        %v977 = vlaneseq
        %v978 = vshrl.u32 %v977, 7
        %v979 = vsub.s32 0, %v978
        %v980 = vrot.slane %v431, %v979
        %v981 = vadd.f32 %v975, %v980
        %v982 = vadd.f32 %v976, %v980
        %v983 = vmax.f32 %v981, 0.0
        %v984 = vmax.f32 %v982, 0.0
        %v985 = vpack.c.bf16 %v984, %v983
        %v986 = vld [vmem:[#allocation13] sm:$0xf]
        %v987 = vld [vmem:[#allocation13 + $0x4] sm:$0xf]
        %v988 = vld [vmem:[#allocation13 + $0x8] sm:$0xf]
        %v989 = vld [vmem:[#allocation13 + $0xc] sm:$0xf]
        %v990 = vld [vmem:[#allocation13 + $0x10] sm:$0xf]
        %v991 = vld [vmem:[#allocation13 + $0x14] sm:$0xf]
        %v992 = vld [vmem:[#allocation13 + $0x18] sm:$0xf]
        %v993 = vld [vmem:[#allocation13 + $0x1c] sm:$0xf]
        %v994 = vld [vmem:[#allocation13 + $0x20] sm:$0xf]
        %v995 = vld [vmem:[#allocation13 + $0x24] sm:$0xf]
        %v996 = vld [vmem:[#allocation13 + $0x28] sm:$0xf]
        %v997 = vld [vmem:[#allocation13 + $0x2c] sm:$0xf]
        %v998 = vld [vmem:[#allocation13 + $0x30] sm:$0xf]
        %v999 = vld [vmem:[#allocation13 + $0x34] sm:$0xf]
        %v1000 = vld [vmem:[#allocation13 + $0x38] sm:$0xf]
        %v1001 = vld [vmem:[#allocation13 + $0x3c] sm:$0xf]
        %v1002 = vlaneseq
        %v1003 = vshrl.u32 %v1002, 7
        %v1004 = vsub.s32 0, %v1003
        %v1005 = vrot.slane %v427, %v1004
        %v1022 = vunpack.c.l.b16 %v986
        %v1023 = vunpack.c.l.b16 %v987
        %v1024 = vunpack.c.l.b16 %v988
        %v1025 = vunpack.c.l.b16 %v989
        %v1026 = vunpack.c.l.b16 %v990
        %v1027 = vunpack.c.l.b16 %v991
        %v1028 = vunpack.c.l.b16 %v992
        %v1029 = vunpack.c.l.b16 %v993
        %v1030 = vunpack.c.l.b16 %v994
        %v1031 = vunpack.c.l.b16 %v995
        %v1032 = vunpack.c.l.b16 %v996
        %v1033 = vunpack.c.l.b16 %v997
        %v1034 = vunpack.c.l.b16 %v998
        %v1035 = vunpack.c.l.b16 %v999
        %v1036 = vunpack.c.l.b16 %v1000
        %v1037 = vunpack.c.l.b16 %v1001
        %v1038 = vpack.c.b16 %v1023, %v1022
        %v1039 = vpack.c.b16 %v1025, %v1024
        %v1040 = vpack.c.b16 %v1027, %v1026
        %v1041 = vpack.c.b16 %v1029, %v1028
        %v1042 = vpack.c.b16 %v1031, %v1030
        %v1043 = vpack.c.b16 %v1033, %v1032
        %v1044 = vpack.c.b16 %v1035, %v1034
        %v1045 = vpack.c.b16 %v1037, %v1036
        %1054 = vmatprep.subr.bf16.mxu0 0
        %1055 = vmatpush1.bf16.msra.mxu0 %v1045
        %1056 = vmatprep.subr.bf16.mxu0 0
        %1057 = vmatpush1.bf16.msra.mxu0 %v1044
        %1058 = vmatprep.subr.bf16.mxu0 0
        %1059 = vmatpush1.bf16.msra.mxu0 %v1043
        %1060 = vmatprep.subr.bf16.mxu0 0
        %1061 = vmatpush1.bf16.msra.mxu0 %v1042
        %1062 = vmatprep.subr.bf16.mxu0 0
        %1063 = vmatpush1.bf16.msra.mxu0 %v1041
        %1064 = vmatprep.subr.bf16.mxu0 0
        %1065 = vmatpush1.bf16.msra.mxu0 %v1040
        %1066 = vmatprep.subr.bf16.mxu0 0
        %1067 = vmatpush1.bf16.msra.mxu0 %v1039
        %1068 = vmatprep.subr.bf16.mxu0 0
        %1069 = vmatpush1.bf16.msra.mxu0 %v1038
        %1070 = vmatprep.subr.bf16.mxu0 0
        %1071 = vmatpush2.bf16.msra.mxu0 0
        %1072 = vmatprep.subr.bf16.mxu0 0
        %1073 = vmatpush2.bf16.msra.mxu0 0
        %1074 = vmatprep.subr.bf16.mxu0 0
        %1075 = vmatpush2.bf16.msra.mxu0 0
        %1076 = vmatprep.subr.bf16.mxu0 0
        %1077 = vmatpush2.bf16.msra.mxu0 0
        %1078 = vmatprep.subr.bf16.mxu0 0
        %1079 = vmatpush2.bf16.msra.mxu0 0
        %1080 = vmatprep.subr.bf16.mxu0 0
        %1081 = vmatpush2.bf16.msra.mxu0 0
        %1082 = vmatprep.subr.bf16.mxu0 0
        %1083 = vmatpush2.bf16.msra.mxu0 0
        %1084 = vmatprep.subr.bf16.mxu0 0
        %1085 = vmatpush2.bf16.msra.mxu0 0
        %1086 = vmatprep.mubr.bf16.mxu0 0
        %1087 = vmatmul.mubr.bf16.gmra.mxu0 %v985
        %v1088 = vpop.f32.mrf.mxu0
        %v1089 = vadd.f32 %v1005, %v1088
        %v1090 = vpop.f32.mrf.mxu0
        %v1091 = vpop.f32.mrf.mxu0
        %v1092 = vadd.f32 %v1005, %v1091
        %v1093 = vpop.f32.mrf.mxu0
        %1094 = vdwg.mxu0
        %v1095 = vunpack.c.l.bf16 %v432
        %v1096 = vunpack.c.l.bf16 %v433
        %v1097 = vadd.f32 %v1095, %v1089
        %v1098 = vadd.f32 %v1096, %v1092
        %1099 = vst [vmem:[%s420] sm:$0xff] %v1097
        %1100 = vst [vmem:[%s420 + $0x8] sm:$0xff] %v1098
        %s1101 = sand.u32 %s212, 1
        %s1102 = scalar_lea.sflag [#allocation4], %s1101
        %s1103 = sand.u32 %s212, 1
        %s1104 = smul.addr %s1103, 16
        %s1105 = scalar_lea.vmem [#allocation14], %s1104
        // Predicated region
        $region77: #{tpu_custom_call.1} parent=47 // pred_check
          %p1106 = pneg %p222
        $region78: #{tpu_custom_call.1} parent=47 // pred_check_branch
          %1108 = sbr.rel (%p1106) target = $region80
        $region79: #{tpu_custom_call.1} parent=47 // pred_region
          %s1109 = smul.u32 2, %s34
          %s1111 = ssub.s32 256, 256
          %1112 = vsyncadd %s1102, %s1111
          %s1113 = smul.addr %s33, 4
          %s1114 = sadd.s32 %s1109, %s1113
          %s1115 = smul.addr %s1114, 128
          %s1116 = scalar_lea.hbm %s7, %s1115
          %s1117 = sshll.u32 %s1105, 4
          %s1118 = int_to_ptr.vmem [resolvable:$true] %s1117
          %1123 = dma.vmem_to_hbm [thread:$0]  %s1118, 256, %s1116, %s1102, 128, 128, 8
        $region80: #{tpu_custom_call.1} parent=47 // pred_fallthru
          _
      $region48: #{tpu_custom_call.1} parent=5 // pred_fallthru
        _
      %p1124 = scmp.le.s32.totalorder 2, %s24
      // Predicated region
      $region81: #{tpu_custom_call.1} parent=5 // pred_check
        %p1125 = pneg %p1124
      $region82: #{tpu_custom_call.1} parent=5 // pred_check_branch
        %1127 = sbr.rel (%p1125) target = $region84
      $region83: #{tpu_custom_call.1} parent=5 // pred_region
        %s1128 = ssub.s32 %s24, 2
        // Predicated region
        $region85: #{tpu_custom_call.1} parent=83 // pred_check
          %p1129 = pneg %p228
        $region86: #{tpu_custom_call.1} parent=83 // pred_check_branch
          %1131 = sbr.rel (%p1129) target = $region88
        $region87: #{tpu_custom_call.1} parent=83 // pred_region
          %s1132 = sand.u32 %s213, 1
          %s1133 = scalar_lea.sflag [#allocation4], %s1132
          %s1134 = sand.u32 %s213, 1
          %s1135 = smul.addr %s1134, 16
          %s1136 = scalar_lea.vmem [#allocation14], %s1135
          %1137 = dma.done %s1133, 256
        $region88: #{tpu_custom_call.1} parent=83 // pred_fallthru
          _
      $region84: #{tpu_custom_call.1} parent=5 // pred_fallthru
        _
    $region6: #{tpu_custom_call.1} parent=1 // loop_footer
      %s28 = sadd.s32 1, %s24
    $region7: #{tpu_custom_call.1} parent=1 // loop_footer_branch
      %23 = sbr.rel target = $region3
    $region8: #{tpu_custom_call.1} parent=1 // loop_exit
      _
    %1138 = vsyncpa [#allocation3], 1
    %s1139 = scalar_lea.sflag [#allocation3], 1
    %1140 = vsyncpa %s1139, 1
    %1141 = vsyncpa [#allocation6], 1
    %s1142 = scalar_lea.sflag [#allocation6], 1
    %1143 = vsyncpa %s1142, 1
    %1144 = vsyncpa [#allocation9], 1
    %1145 = vsyncpa [#allocation12], 1
    %1146 = vsyncpa [#allocation4], 1
    %s1147 = scalar_lea.sflag [#allocation4], 1
    %1148 = vsyncpa %s1147, 1

</llo_original>
